<compile_context>
chip_gen: v5e
topology: v5e:2x2
jax: 0.10.0
libtpu: 0.0.40
codegen_flags: <defaults>
</compile_context>

<pallas_src>
import functools

import jax
import jax.numpy as jnp
from jax.experimental import pallas as pl
from jax.experimental.pallas import tpu as pltpu


# --------------------------- VMEM budgeting ---------------------------------

@functools.lru_cache(maxsize=1)
def _vmem_budgets():
    """(stream_budget_bytes, vmem_limit_bytes) derived from the local chip."""
    cap = 64 * 1024 * 1024          # conservative fallback (v7x per-TC VMEM)
    try:
        cap = int(pltpu.get_tpu_info().vmem_capacity_bytes)
    except Exception:
        pass
    return int(cap * 0.70), int(cap * 0.90)


def _pick_batch_tile(B, target=8):
    """Batch tile <= target that is a multiple of 8 (sublane rule for the
    2-D (B,1) side inputs / (B,H) output) or the full batch."""
    if B <= target:
        return B
    t = (target // 8) * 8
    while t >= 8:
        if B % t == 0:
            return t
        t -= 8
    return B


def _pick_seq_tile(S, Bt, Ht, n_stream, isz, max_tile, stream_budget):
    """Returns (St, Spad).

    St is a multiple of the dtype packing granularity, sized so the
    double-buffered streamed hidden tiles, their in-kernel temporaries and
    the lane-padded (x128) mask double-buffer fit `stream_budget`.  If S has
    no suitable divisor, S is padded up to Spad = ceil(S/St)*St (padded rows
    carry zero mask, contribute nothing, and are skipped by the length
    clamp anyway).
    """
    g = 8 * max(1, 4 // isz)                       # 8 f32, 16 bf16, 32 int8
    # per seq-row VMEM: streams double-buffered + ~1 dtype temp + f32 reduce
    # headroom, plus the lane-padded mask double-buffer.
    per_row = n_stream * Bt * Ht * (3 * isz + 4) + 2 * Bt * 128 * isz
    max_rows = max(g, stream_budget // per_row)
    target = int(min(S, max_rows, max_tile))
    if S <= target:
        return S, S                                # full extent, no padding
    t = (target // g) * g
    while t >= g:
        if S % t == 0:
            return t, S
        t -= g
    St = max(g, (target // g) * g)                 # awkward S: pad
    Spad = -(-S // St) * St
    return St, Spad


# ------------------------------- kernels ------------------------------------

def _cls_kernel(h_ref, o_ref):
    # h_ref : (Bt, St_cls, H) -- only the leading sublane tile holding [CLS]
    o_ref[...] = h_ref[:, 0, :]


def _make_masked_mean_kernel(St, n_stream):
    def kernel(maxlen_ref, mask_ref, inv_ref, *rest):
        h_refs = rest[:n_stream]
        o_ref = rest[n_stream]
        acc_ref = rest[n_stream + 1]

        i = pl.program_id(0)
        s = pl.program_id(2)

        @pl.when(s == 0)
        def _init():
            acc_ref[...] = jnp.zeros_like(acc_ref)

        # Skip compute for seq tiles entirely past the last real token of
        # every row in this batch tile (index_map already skipped their DMA).
        @pl.when(s * St < maxlen_ref[i])
        def _accumulate():
            m = mask_ref[...]                       # (Bt, St, 1) hidden dtype
            # multiply in the input dtype (mask is 0/1 -> exact), upcast only
            # inside the reduce: no (Bt, St, H) f32 temporary.
            part = jnp.sum(h_refs[0][...] * m, axis=1, dtype=jnp.float32)
            for hr in h_refs[1:]:
                part = part + jnp.sum(hr[...] * m, axis=1, dtype=jnp.float32)
            acc_ref[...] += part

        @pl.when(s == pl.num_programs(2) - 1)
        def _finalize():
            # NOTE: rows whose mask is all-zero yield inf/nan, matching the
            # PyTorch reference (division by a zero denominator).
            o_ref[...] = (acc_ref[...] * inv_ref[...]).astype(o_ref.dtype)

    return kernel


# ------------------------------ wrappers -------------------------------------

def _cls_pool(last_hidden):
    B, S, H = last_hidden.shape
    Bt = _pick_batch_tile(B)
    St = 8 if S >= 8 else S              # minimal sublane tile containing row 0
    _, vmem_limit = _vmem_budgets()
    isz = last_hidden.dtype.itemsize
    cost = pl.CostEstimate(flops=0, transcendentals=0,
                           bytes_accessed=int(B * St * H * isz + B * H * isz))
    return pl.pallas_call(
        _cls_kernel,
        out_shape=jax.ShapeDtypeStruct((B, H), last_hidden.dtype),
        grid=(B // Bt,),
        in_specs=[pl.BlockSpec((Bt, St, H), lambda i: (i, 0, 0))],
        out_specs=pl.BlockSpec((Bt, H), lambda i: (i, 0)),
        compiler_params=pltpu.CompilerParams(
            dimension_semantics=("parallel",),
            vmem_limit_bytes=vmem_limit),
        cost_estimate=cost,
    )(last_hidden)


def _masked_mean_pool(attention_mask, hiddens, scale, max_seq_tile=2048):
    """pooled = scale * sum_s(sum_k hiddens[k] * mask) / mask.sum(-1)"""
    n_stream = len(hiddens)
    B, S, H = hiddens[0].shape
    dtype = hiddens[0].dtype
    isz = dtype.itemsize

    stream_budget, vmem_limit = _vmem_budgets()

    Bt = _pick_batch_tile(B)
    nb = B // Bt

    # v7x megacore: guarantee >=2 "parallel" programs; if the batch axis
    # cannot provide them, split the hidden dim into two 128-aligned tiles.
    if nb < 2 and H % 256 == 0:
        Ht, n_h = H // 2, 2
    else:
        Ht, n_h = H, 1

    St, Spad = _pick_seq_tile(S, Bt, Ht, n_stream, isz, max_seq_tile,
                              stream_budget)

    mask_f32 = attention_mask.astype(jnp.float32)                   # (B, S)
    den = jnp.sum(mask_f32, axis=-1, keepdims=True)                 # (B, 1)
    inv_den = (scale / den).astype(jnp.float32)                     # (B, 1)

    # (last real token index + 1) per row; max per batch tile -> SMEM prefetch
    pos1 = jnp.arange(1, S + 1, dtype=jnp.int32)
    lengths = jnp.max(jnp.where(attention_mask != 0, pos1[None, :], 0), axis=-1)
    maxlen_tile = jnp.max(lengths.reshape(nb, Bt), axis=-1).astype(jnp.int32)

    # mask streamed in the hidden dtype (0/1 exact) with a lane-splat layout
    mask3 = attention_mask.astype(dtype).reshape(B, S, 1)
    if Spad != S:
        pad = Spad - S
        mask3 = jnp.pad(mask3, ((0, 0), (0, pad), (0, 0)))
        hiddens = tuple(jnp.pad(h, ((0, 0), (0, pad), (0, 0))) for h in hiddens)

    def clamp_s(i, s, ml_ref):
        n_valid = (ml_ref[i] + St - 1) // St
        return jnp.minimum(s, jnp.maximum(n_valid - 1, 0))

    mask_map = lambda i, h, s, ml: (i, clamp_s(i, s, ml), 0)
    hid_map = lambda i, h, s, ml: (i, clamp_s(i, s, ml), h)
    row_map = lambda i, h, s, ml: (i, 0)
    out_map = lambda i, h, s, ml: (i, h)

    grid_spec = pltpu.PrefetchScalarGridSpec(
        num_scalar_prefetch=1,
        grid=(nb, n_h, Spad // St),
        in_specs=[pl.BlockSpec((Bt, St, 1), mask_map),      # mask (lane splat)
                  pl.BlockSpec((Bt, 1), row_map)]           # scale / mask.sum
                 + [pl.BlockSpec((Bt, St, Ht), hid_map) for _ in range(n_stream)],
        out_specs=pl.BlockSpec((Bt, Ht), out_map),           # resident over s
        scratch_shapes=[pltpu.VMEM((Bt, Ht), jnp.float32)],
    )

    bytes_accessed = (n_stream * B * S * H * isz + B * S * isz
                      + B * 4 + B * H * isz)
    cost = pl.CostEstimate(flops=(2 * n_stream + 1) * B * S * H + 2 * B * H,
                           transcendentals=0,
                           bytes_accessed=int(bytes_accessed))

    kernel = _make_masked_mean_kernel(St, n_stream)
    return pl.pallas_call(
        kernel,
        out_shape=jax.ShapeDtypeStruct((B, H), dtype),
        grid_spec=grid_spec,
        compiler_params=pltpu.CompilerParams(
            dimension_semantics=("parallel", "parallel", "arbitrary"),
            vmem_limit_bytes=vmem_limit),
        cost_estimate=cost,
    )(maxlen_tile, mask3, inv_den, *hiddens)


class PoolerPallas:
    """Parameter-free pooler (Pallas/TPU port of the PyTorch Pooler)."""

    VALID = ("cls", "cls_before_pooler", "avg", "avg_top2", "avg_first_last")

    def __init__(self, pooler_type, max_seq_tile=2048):
        assert pooler_type in self.VALID, "unrecognized pooling type %s" % pooler_type
        self.pooler_type = pooler_type
        self.max_seq_tile = max_seq_tile

    def __call__(self, attention_mask, last_hidden_state, hidden_states):
        """
        attention_mask    : (B, S)
        last_hidden_state : (B, S, H)
        hidden_states     : tuple/list of (B, S, H), layer 0 .. L
        """
        if self.pooler_type in ("cls", "cls_before_pooler"):
            # As in the original module, 'cls' assumes any upstream MLP
            # pooler is applied outside; the Pooler itself returns row 0.
            return _cls_pool(last_hidden_state)
        elif self.pooler_type == "avg":
            return _masked_mean_pool(attention_mask, (last_hidden_state,),
                                     scale=1.0, max_seq_tile=self.max_seq_tile)
        elif self.pooler_type == "avg_first_last":
            return _masked_mean_pool(attention_mask,
                                     (hidden_states[0], hidden_states[-1]),
                                     scale=0.5, max_seq_tile=self.max_seq_tile)
        elif self.pooler_type == "avg_top2":
            return _masked_mean_pool(attention_mask,
                                     (hidden_states[-1], hidden_states[-2]),
                                     scale=0.5, max_seq_tile=self.max_seq_tile)
        else:
            raise NotImplementedError


# ------------------------------ reference ------------------------------------

def _reference(pooler_type, attention_mask, last_hidden, hidden_states):
    mask = attention_mask.astype(jnp.float32)
    if pooler_type in ("cls", "cls_before_pooler"):
        return last_hidden[:, 0]
    if pooler_type == "avg":
        h = last_hidden
    elif pooler_type == "avg_first_last":
        h = (hidden_states[0] + hidden_states[-1]) / 2.0
    elif pooler_type == "avg_top2":
        h = (hidden_states[-1] + hidden_states[-2]) / 2.0
    else:
        raise NotImplementedError
    return (h * mask[:, :, None]).sum(1) / mask.sum(-1)[:, None]


# -------------------------------- main ---------------------------------------

def _check_case(B, S, H, L, max_seq_tile, seed=0):
    key = jax.random.PRNGKey(seed)
    k_last, k_hs = jax.random.split(key, 2)
    last_hidden = jax.random.normal(k_last, (B, S, H), dtype=jnp.float32)
    hidden_states = tuple(
        jax.random.normal(jax.random.fold_in(k_hs, i), (B, S, H), dtype=jnp.float32)
        for i in range(L)
    )
    # deterministic mask lengths in [1, S] (never all-pad -> no div-by-zero)
    lengths = (jnp.arange(B, dtype=jnp.int32) % (S - 1)) + 1
    lengths = lengths.at[0].set(S)
    attention_mask = (jnp.arange(S)[None, :] < lengths[:, None]).astype(jnp.float32)

    all_ok = True
    for ptype in PoolerPallas.VALID:
        pooler = PoolerPallas(ptype, max_seq_tile=max_seq_tile)
        out = jax.block_until_ready(
            pooler(attention_mask, last_hidden, hidden_states))
        ref = _reference(ptype, attention_mask, last_hidden, hidden_states)
        if out.shape != (B, H) or not jnp.allclose(out, ref, atol=1e-5, rtol=1e-5):
            all_ok = False
            print(f"MISMATCH: B={B} S={S} H={H} pooler_type={ptype}")
    return all_ok


if __name__ == "__main__":
    ok = True
    # tiny config consistent with the module (batch=2, seq=8, hidden=32)
    ok &= _check_case(B=2, S=8, H=32, L=3, max_seq_tile=2048, seed=0)
    # (batch, seq) grid + accumulator + padded-tile skip (seq innermost)
    ok &= _check_case(B=16, S=64, H=128, L=3, max_seq_tile=16, seed=1)
    # H-split megacore path (B//Bt < 2, H % 256 == 0) + awkward-S padding path
    ok &= _check_case(B=4, S=36, H=256, L=3, max_seq_tile=16, seed=2)

    if ok:
        print("KERNEL_OK")
</pallas_src>

<mosaic_0001>
module attributes {stable_mosaic.version = 11 : i64} {
  func.func @_cls_kernel(%arg0: i32, %arg1: memref<2x8x32xf32, #tpu.memory_space<vmem>>, %arg2: memref<2x32xf32, #tpu.memory_space<vmem>>) attributes {dimension_semantics = [#tpu.dimension_semantics<parallel>], iteration_bounds = array<i64: 1>, scalar_prefetch = 0 : i64, scratch_operands = 0 : i64, tpu.core_type = #tpu.core_type<tc>, window_params = [{transform_indices = @transform_0, window_bounds = array<i64: 2, 8, 32>}, {transform_indices = @transform_1, window_bounds = array<i64: 2, 32>}]} {
    %c0 = arith.constant 0 : index
    %c0_0 = arith.constant 0 : index
    %c0_1 = arith.constant 0 : index
    %0 = vector.load %arg1[%c0, %c0_0, %c0_1] : memref<2x8x32xf32, #tpu.memory_space<vmem>>, vector<2x1x32xf32>
    %1 = vector.shape_cast %0 : vector<2x1x32xf32> to vector<2x32xf32>
    %c0_2 = arith.constant 0 : index
    %c0_3 = arith.constant 0 : index
    %2 = vector.load %arg2[%c0_2, %c0_3] : memref<2x32xf32, #tpu.memory_space<vmem>>, vector<2x32xf32>
    tpu.vector_store %arg2[%c0_2, %c0_3], %1 {strides = array<i32>} : memref<2x32xf32, #tpu.memory_space<vmem>>, vector<2x32xf32>,
    return
  }
  func.func @transform_0(%arg0: i32) -> (i32, i32, i32) {
    %c0_i32 = arith.constant 0 : i32
    %c0_i32_0 = arith.constant 0 : i32
    %c0_i32_1 = arith.constant 0 : i32
    return %arg0, %c0_i32, %c0_i32_0 : i32, i32, i32
  }
  func.func @transform_1(%arg0: i32) -> (i32, i32) {
    %c0_i32 = arith.constant 0 : i32
    %c0_i32_0 = arith.constant 0 : i32
    return %arg0, %c0_i32 : i32, i32
  }
}

</mosaic_0001>

<llo_original>
// kernel: tpu_custom_call.1
$region0: #{tpu_custom_call.1}
  #allocation0 [shape = 'u32[]', space=smem, size = 0x4, offset = 0x4, fixed_abs, tag = 'smem constant byte address 0x4 - core index']
  #allocation1 [shape = 'u32[72,128]{1,0:T(1,128)}', space=vmem, size = 0x9000, scoped, tag = 'internal scratch']
  %s0 = inlined_call_operand.hbm [shape: f32[2,8,32], index: 0, kind: input, shape index: {}]
  %s1 = inlined_call_operand.hbm [shape: f32[2,32], index: 1, kind: output, shape index: {}]
  %s2 = sld [smem:[#allocation0]]
  $region18: #{tpu_custom_call.1} parent=0
    _
  %s4 = ssub.s32 1, %s2
  %s5 = scalar_select 0, %s4, %s2
  $region1: #{tpu_custom_call.1} parent=0
    #allocation2 [shape = 'u8[8192]{0}', space=vmem, size = 0x2000, scoped, tag = 'input window, operand 0, single buffered']
    #allocation3 [shape = 's32[1]{0}', space=sflag, size = 0x4, scoped, tag = 'scoped memory for tpu_custom_call.1']
    #allocation4 [shape = 's32[1]{0}', space=sflag, size = 0x4, scoped, tag = 'scoped memory for tpu_custom_call.1']
    #allocation5 [shape = 'u8[1024]{0}', space=vmem, size = 0x400, scoped, tag = 'output window, operand 0, single buffered']
    %6 = vsyncpa [#allocation3], 0
    %7 = vsyncpa [#allocation4], 0
    // Predicated region
    $region2: #{tpu_custom_call.1} parent=1 // pred_check
      _
    $region3: #{tpu_custom_call.1} parent=1 // pred_check_branch
      %9 = sbr.rel (0) target = $region5
    $region4: #{tpu_custom_call.1} parent=1 // pred_region
      %11 = vsyncadd [#allocation3], 0
      %s12 = sshll.u32 %s0, 4
      %s13 = int_to_ptr.hbm [resolvable:$true] %s12
      %s14 = sshll.u32 [#allocation2], 4
      %s15 = int_to_ptr.vmem [resolvable:$true] %s14
      %20 = dma.hbm_to_vmem [thread:$0]  %s13, 256, %s15, [#allocation3], 128, 128, 8
    $region5: #{tpu_custom_call.1} parent=1 // pred_fallthru
      _
    // Predicated region
    $region6: #{tpu_custom_call.1} parent=1 // pred_check
      _
    $region7: #{tpu_custom_call.1} parent=1 // pred_check_branch
      %22 = sbr.rel (0) target = $region9
    $region8: #{tpu_custom_call.1} parent=1 // pred_region
      %24 = dma.done [#allocation3], 256
    $region9: #{tpu_custom_call.1} parent=1 // pred_fallthru
      _
    %v25 = vld [vmem:[#allocation2] sm:$0x1]
    %v26 = vld [vmem:[#allocation2 + $0x8] sm:$0x1]
    %v29 = vrot.slane %v26, 7
    %vm30 = vcmask 1041409
    %v31 = vsel %vm30, %v29, %v25
    %vm33 = vcmask 254976
    %34 = vst.msk [vmem:[#allocation5] sm:$0x3] %vm33, %v31
    // Predicated region
    $region10: #{tpu_custom_call.1} parent=1 // pred_check
      _
    $region11: #{tpu_custom_call.1} parent=1 // pred_check_branch
      %36 = sbr.rel (0) target = $region13
    $region12: #{tpu_custom_call.1} parent=1 // pred_region
      %38 = vsyncadd [#allocation4], 0
      %s40 = sshll.u32 [#allocation5], 4
      %s41 = int_to_ptr.vmem [resolvable:$true] %s40
      %s42 = sshll.u32 %s1, 4
      %s43 = int_to_ptr.hbm [resolvable:$true] %s42
      %45 = dma.vmem_to_hbm [thread:$0]  %s41, 32, %s43, [#allocation4]
    $region13: #{tpu_custom_call.1} parent=1 // pred_fallthru
      _
    // Predicated region
    $region14: #{tpu_custom_call.1} parent=1 // pred_check
      _
    $region15: #{tpu_custom_call.1} parent=1 // pred_check_branch
      %47 = sbr.rel (0) target = $region17
    $region16: #{tpu_custom_call.1} parent=1 // pred_region
      %49 = dma.done [#allocation4], 32
    $region17: #{tpu_custom_call.1} parent=1 // pred_fallthru
      _
    %50 = vsyncpa [#allocation3], 1
    %51 = vsyncpa [#allocation4], 1

</llo_original>
